<compile_context>
chip_gen: v6e
topology: v6e:2x2x1
jax: 0.10.0
libtpu: 0.0.40
codegen_flags: <defaults>
</compile_context>

<pallas_src>
import jax
import jax.numpy as jnp
from jax.experimental import pallas as pl
from jax.experimental.pallas import tpu as pltpu


def _round_up(x, m):
    return (x + m - 1) // m * m


def _ffnn_kernel(x_ref, w13_ref, w2_ref, o_ref, acc_ref):
    # x_ref   : (tm, D)       activation row tile (resident across the f axis)
    # w13_ref : (D, 2*tf)     [w1_tile | w3_tile] for ffn-slice f (streamed)
    # w2_ref  : (tf, D)       down-projection slice f (streamed)
    # o_ref   : (tm, D)       output row tile (resident across the f axis)
    # acc_ref : (tm, D) f32   VMEM accumulator
    f = pl.program_id(1)

    @pl.when(f == 0)
    def _():
        acc_ref[...] = jnp.zeros_like(acc_ref)

    x = x_ref[...]
    tf = w2_ref.shape[0]

    # One MXU push for gate + up projections: (tm, D) @ (D, 2*tf) -> f32.
    h13 = jnp.dot(x, w13_ref[...], preferred_element_type=jnp.float32)
    h1 = h13[:, :tf]
    h3 = h13[:, tf:]
    h = (h1 * jax.nn.sigmoid(h1)) * h3            # SiLU(h1) * h3  (VPU + EUP)

    # Partial down-projection for this ffn slice, accumulated in f32.
    acc_ref[...] += jnp.dot(h.astype(x.dtype), w2_ref[...],
                            preferred_element_type=jnp.float32)

    @pl.when(f == pl.num_programs(1) - 1)
    def _():
        o_ref[...] = acc_ref[...].astype(o_ref.dtype)


def ffnn_forward(x, w1, w3, w2, *, tm=None, tf=None):
    """x: (batch, seq, d_model); w1/w3: (d_model, ffn); w2: (ffn, d_model)."""
    B, S, D = x.shape
    F_dim = w1.shape[1]
    assert w1.shape == (D, F_dim) and w3.shape == (D, F_dim) and w2.shape == (F_dim, D)
    assert D % 128 == 0, "d_model must be a multiple of 128 (lane width)"

    dtype = x.dtype
    row_mult = 16 if dtype == jnp.bfloat16 else 8  # sublane packing
    M = B * S

    if tm is None:
        tm = min(256, _round_up(M, row_mult))
    if tf is None:
        # TODO(synk): per-generation tuning — larger tf on v6e (128 MiB VMEM),
        # smaller on v7x (64 MiB) / v5e (bandwidth-bound, maximize tm instead).
        tf = min(1024, _round_up(F_dim, 128))
    assert tm % row_mult == 0, "row tile must be a multiple of the sublane pack"
    assert tf % 128 == 0, "ffn tile must be a multiple of 128 (lane width)"

    # Pad rows / ffn dim so every block is full (zero rows / zero weight
    # columns contribute nothing to the result).
    M_pad = _round_up(M, tm)
    F_pad = _round_up(F_dim, tf)

    x2d = x.reshape(M, D)
    if M_pad != M:
        x2d = jnp.pad(x2d, ((0, M_pad - M), (0, 0)))
    if F_pad != F_dim:
        w1 = jnp.pad(w1, ((0, 0), (0, F_pad - F_dim)))
        w3 = jnp.pad(w3, ((0, 0), (0, F_pad - F_dim)))
        w2 = jnp.pad(w2, ((0, F_pad - F_dim), (0, 0)))

    nf = F_pad // tf
    # Pack gate/up weights so ffn-tile f of both lives in one lane-contiguous
    # (D, 2*tf) block -> single MXU push and single DMA stream per grid step.
    w13 = jnp.concatenate(
        [w1.reshape(D, nf, tf), w3.reshape(D, nf, tf)], axis=-1
    ).reshape(D, nf * 2 * tf)

    # Explicit scoped-VMEM budget: double-buffered tiles + f32 accumulator,
    # with 2x headroom, clamped to [32 MiB, 64 MiB] so it is valid on every
    # generation (v7x physical VMEM is 64 MiB).
    itemsize = jnp.dtype(dtype).itemsize
    est = (2 * (tm * D + D * 2 * tf + tf * D + tm * D) * itemsize
           + tm * D * 4)
    vmem_limit = int(min(max(2 * est, 32 * 1024 * 1024), 64 * 1024 * 1024))

    out2d = pl.pallas_call(
        _ffnn_kernel,
        out_shape=jax.ShapeDtypeStruct((M_pad, D), dtype),
        grid_spec=pltpu.PrefetchScalarGridSpec(
            num_scalar_prefetch=0,
            grid=(M_pad // tm, nf),                 # reduction (ffn) axis innermost
            in_specs=[
                pl.BlockSpec((tm, D), lambda i, f: (i, 0)),      # x row tile (resident over f)
                pl.BlockSpec((D, 2 * tf), lambda i, f: (0, f)),  # [w1|w3] slice (streamed)
                pl.BlockSpec((tf, D), lambda i, f: (f, 0)),      # w2 slice (streamed)
            ],
            out_specs=pl.BlockSpec((tm, D), lambda i, f: (i, 0)),
            scratch_shapes=[pltpu.VMEM((tm, D), jnp.float32)],
        ),
        compiler_params=pltpu.CompilerParams(
            dimension_semantics=("parallel", "arbitrary"),
            vmem_limit_bytes=vmem_limit,
        ),
    )(x2d, w13, w2)

    if M_pad != M:
        out2d = out2d[:M]
    return out2d.reshape(B, S, D)


def ffnn_reference_f32(x, w1, w3, w2):
    xf, w1f, w3f, w2f = (a.astype(jnp.float32) for a in (x, w1, w3, w2))
    h1 = xf @ w1f
    h3 = xf @ w3f
    return ((h1 * jax.nn.sigmoid(h1)) * h3) @ w2f


if __name__ == "__main__":
    # Small, shape-consistent config (the real ModelArgs uses d_model=4096,
    # ffn=14336); small tiles chosen to exercise both grid axes.
    batch, seq, d_model, ffn_dim = 2, 24, 256, 512
    tm, tf = 16, 128

    key = jax.random.PRNGKey(0)
    kx, k1, k3, k2 = jax.random.split(key, 4)

    dtype = jnp.bfloat16
    x = jax.random.normal(kx, (batch, seq, d_model), dtype=jnp.float32).astype(dtype)
    w1 = (jax.random.normal(k1, (d_model, ffn_dim), dtype=jnp.float32)
          * d_model ** -0.5).astype(dtype)
    w3 = (jax.random.normal(k3, (d_model, ffn_dim), dtype=jnp.float32)
          * d_model ** -0.5).astype(dtype)
    w2 = (jax.random.normal(k2, (ffn_dim, d_model), dtype=jnp.float32)
          * ffn_dim ** -0.5).astype(dtype)

    out = jax.block_until_ready(ffnn_forward(x, w1, w3, w2, tm=tm, tf=tf))

    ref = ffnn_reference_f32(x, w1, w3, w2)
    assert out.shape == (batch, seq, d_model)
    out_f32 = out.astype(jnp.float32)
    max_err = float(jnp.max(jnp.abs(out_f32 - ref)))
    assert jnp.allclose(out_f32, ref, atol=5e-2, rtol=5e-2), f"mismatch vs ref, max_err={max_err}"

    print("KERNEL_OK")
</pallas_src>

<mosaic_0001>
module attributes {stable_mosaic.version = 11 : i64} {
  func.func @_ffnn_kernel(%arg0: i32, %arg1: i32, %arg2: memref<16x256xbf16, #tpu.memory_space<vmem>>, %arg3: memref<256x256xbf16, #tpu.memory_space<vmem>>, %arg4: memref<128x256xbf16, #tpu.memory_space<vmem>>, %arg5: memref<16x256xbf16, #tpu.memory_space<vmem>>, %arg6: memref<16x256xf32, #tpu.memory_space<vmem>>) attributes {dimension_semantics = [#tpu.dimension_semantics<parallel>, #tpu.dimension_semantics<arbitrary>], iteration_bounds = array<i64: 3, 4>, scalar_prefetch = 0 : i64, scratch_operands = 1 : i64, tpu.core_type = #tpu.core_type<tc>, window_params = [{transform_indices = @transform_0, window_bounds = array<i64: 16, 256>}, {transform_indices = @transform_1, window_bounds = array<i64: 256, 256>}, {transform_indices = @transform_2, window_bounds = array<i64: 128, 256>}, {transform_indices = @transform_3, window_bounds = array<i64: 16, 256>}]} {
    %c0_i32 = arith.constant 0 : i32
    %0 = arith.cmpi eq, %arg1, %c0_i32 : i32
    %1 = arith.extui %0 : i1 to i32
    %c0_i32_0 = arith.constant 0 : i32
    %2 = arith.cmpi ne, %1, %c0_i32_0 : i32
    scf.if %2 {
      %cst_13 = arith.constant 0.000000e+00 : f32
      %24 = vector.broadcast %cst_13 : f32 to vector<16x256xf32>
      %c0_14 = arith.constant 0 : index
      %c0_15 = arith.constant 0 : index
      %25 = vector.load %arg6[%c0_14, %c0_15] : memref<16x256xf32, #tpu.memory_space<vmem>>, vector<16x256xf32>
      tpu.vector_store %arg6[%c0_14, %c0_15], %24 {strides = array<i32>} : memref<16x256xf32, #tpu.memory_space<vmem>>, vector<16x256xf32>,
    } else {
    }
    %c0 = arith.constant 0 : index
    %c0_1 = arith.constant 0 : index
    %3 = vector.load %arg2[%c0, %c0_1] : memref<16x256xbf16, #tpu.memory_space<vmem>>, vector<16x256xbf16>
    %c0_2 = arith.constant 0 : index
    %c0_3 = arith.constant 0 : index
    %4 = vector.load %arg3[%c0_2, %c0_3] : memref<256x256xbf16, #tpu.memory_space<vmem>>, vector<256x256xbf16>
    %cst = arith.constant dense<0.000000e+00> : vector<16x256xf32>
    %5 = tpu.matmul %3, %4, %cst {dimension_numbers = #tpu.dot_dimension_numbers<[1], [0], [0], [1], [0, 0, 1, 1], [], []>} : vector<16x256xbf16>, vector<256x256xbf16>, vector<16x256xf32> -> vector<16x256xf32>
    %6 = vector.extract_strided_slice %5 {offsets = [0, 0], sizes = [16, 128], strides = [1, 1]} : vector<16x256xf32> to vector<16x128xf32>
    %7 = vector.extract_strided_slice %5 {offsets = [0, 128], sizes = [16, 128], strides = [1, 1]} : vector<16x256xf32> to vector<16x128xf32>
    %8 = arith.negf %6 : vector<16x128xf32>
    %9 = math.exp %8 : vector<16x128xf32>
    %cst_4 = arith.constant 1.000000e+00 : f32
    %10 = vector.broadcast %cst_4 : f32 to vector<16x128xf32>
    %11 = arith.addf %10, %9 : vector<16x128xf32>
    %12 = arith.divf %10, %11 : vector<16x128xf32>
    %13 = arith.mulf %6, %12 : vector<16x128xf32>
    %14 = arith.mulf %13, %7 : vector<16x128xf32>
    %c0_5 = arith.constant 0 : index
    %c0_6 = arith.constant 0 : index
    %15 = vector.load %arg6[%c0_5, %c0_6] : memref<16x256xf32, #tpu.memory_space<vmem>>, vector<16x256xf32>
    %16 = arith.truncf %14 : vector<16x128xf32> to vector<16x128xbf16>
    %c0_7 = arith.constant 0 : index
    %c0_8 = arith.constant 0 : index
    %17 = vector.load %arg4[%c0_7, %c0_8] : memref<128x256xbf16, #tpu.memory_space<vmem>>, vector<128x256xbf16>
    %cst_9 = arith.constant dense<0.000000e+00> : vector<16x256xf32>
    %18 = tpu.matmul %16, %17, %cst_9 {dimension_numbers = #tpu.dot_dimension_numbers<[1], [0], [0], [1], [0, 0, 1, 1], [], []>} : vector<16x128xbf16>, vector<128x256xbf16>, vector<16x256xf32> -> vector<16x256xf32>
    %19 = arith.addf %15, %18 : vector<16x256xf32>
    %c0_10 = arith.constant 0 : index
    %c0_11 = arith.constant 0 : index
    %20 = vector.load %arg6[%c0_10, %c0_11] : memref<16x256xf32, #tpu.memory_space<vmem>>, vector<16x256xf32>
    tpu.vector_store %arg6[%c0_10, %c0_11], %19 {strides = array<i32>} : memref<16x256xf32, #tpu.memory_space<vmem>>, vector<16x256xf32>,
    %c3_i32 = arith.constant 3 : i32
    %21 = arith.cmpi eq, %arg1, %c3_i32 : i32
    %22 = arith.extui %21 : i1 to i32
    %c0_i32_12 = arith.constant 0 : i32
    %23 = arith.cmpi ne, %22, %c0_i32_12 : i32
    scf.if %23 {
      %c0_13 = arith.constant 0 : index
      %c0_14 = arith.constant 0 : index
      %24 = vector.load %arg6[%c0_13, %c0_14] : memref<16x256xf32, #tpu.memory_space<vmem>>, vector<16x256xf32>
      %25 = arith.truncf %24 : vector<16x256xf32> to vector<16x256xbf16>
      %c0_15 = arith.constant 0 : index
      %c0_16 = arith.constant 0 : index
      %26 = vector.load %arg5[%c0_15, %c0_16] : memref<16x256xbf16, #tpu.memory_space<vmem>>, vector<16x256xbf16>
      tpu.vector_store %arg5[%c0_15, %c0_16], %25 {strides = array<i32>} : memref<16x256xbf16, #tpu.memory_space<vmem>>, vector<16x256xbf16>,
    } else {
    }
    return
  }
  func.func @transform_0(%arg0: i32, %arg1: i32) -> (i32, i32) {
    %c0_i32 = arith.constant 0 : i32
    %c0_i32_0 = arith.constant 0 : i32
    return %arg0, %c0_i32 : i32, i32
  }
  func.func @transform_1(%arg0: i32, %arg1: i32) -> (i32, i32) {
    %c0_i32 = arith.constant 0 : i32
    %c0_i32_0 = arith.constant 0 : i32
    return %c0_i32, %arg1 : i32, i32
  }
  func.func @transform_2(%arg0: i32, %arg1: i32) -> (i32, i32) {
    %c0_i32 = arith.constant 0 : i32
    %c0_i32_0 = arith.constant 0 : i32
    return %arg1, %c0_i32 : i32, i32
  }
  func.func @transform_3(%arg0: i32, %arg1: i32) -> (i32, i32) {
    %c0_i32 = arith.constant 0 : i32
    %c0_i32_0 = arith.constant 0 : i32
    return %arg0, %c0_i32 : i32, i32
  }
}

</mosaic_0001>

<llo_original>
// kernel: tpu_custom_call.1
$region0: #{tpu_custom_call.1}
  #allocation0 [shape = 'u32[]', space=smem, size = 0x4, offset = 0x4, fixed_abs, tag = 'smem constant byte address 0x4 - core index']
  #allocation1 [shape = 'u32[144,128]{1,0:T(1,128)}', space=vmem, size = 0x12000, scoped, tag = 'internal scratch']
  #allocation2 [shape = 'f32[16,256]{1,0:T(8,128)}', space=vmem, size = 0x4000, scoped, tag = 'scratch operand']
  %s0 = inlined_call_operand.hbm [shape: bf16[48,256], index: 0, kind: input, shape index: {}]
  %s1 = inlined_call_operand.hbm [shape: bf16[256,1024], index: 1, kind: input, shape index: {}]
  %s2 = inlined_call_operand.hbm [shape: bf16[512,256], index: 2, kind: input, shape index: {}]
  %s3 = inlined_call_operand.hbm [shape: bf16[48,256], index: 3, kind: output, shape index: {}]
  %s4 = sld [smem:[#allocation0]]
  $region65: #{tpu_custom_call.1} parent=0
    _
  %s6 = ssub.s32 1, %s4
  %s7 = scalar_select 0, %s6, %s4
  $region1: #{tpu_custom_call.1} parent=0
    #allocation3 [shape = 'u8[16384]{0}', space=vmem, size = 0x4000, scoped, tag = 'input window, operand 0']
    #allocation4 [shape = 's32[2]{0}', space=sflag, size = 0x8, scoped, tag = 'scoped memory for tpu_custom_call.1']
    #allocation5 [shape = 's32[2]{0}', space=sflag, size = 0x8, scoped, tag = 'scoped memory for tpu_custom_call.1']
    #allocation6 [shape = 'u8[262144]{0}', space=vmem, size = 0x40000, scoped, tag = 'input window, operand 1']
    #allocation7 [shape = 's32[2]{0}', space=sflag, size = 0x8, scoped, tag = 'scoped memory for tpu_custom_call.1']
    #allocation8 [shape = 'u8[131072]{0}', space=vmem, size = 0x20000, scoped, tag = 'input window, operand 2']
    #allocation9 [shape = 'u8[16384]{0}', space=vmem, size = 0x4000, scoped, tag = 'output window, operand 0']
    %8 = vsyncpa [#allocation4], 0
    %s9 = scalar_lea.sflag [#allocation4], 1
    %10 = vsyncpa %s9, 0
    %11 = vsyncpa [#allocation7], 0
    %s12 = scalar_lea.sflag [#allocation7], 1
    %13 = vsyncpa %s12, 0
    %14 = vsyncpa [#allocation5], 0
    %s15 = scalar_lea.sflag [#allocation5], 1
    %16 = vsyncpa %s15, 0
    loop: start=0, step=1, limit=14
    $region2: #{tpu_custom_call.1} parent=1 // loop_pre_header
      _
    $region3: #{tpu_custom_call.1} parent=1 // loop_header
      %s18 = sphi 0, %s22
      %p19 = scmp.ge.s32.totalorder %s18, 14
      %s25 = sphi 0, %s37
      %s26 = sphi 0, %s33
      %s27 = sphi 0, %s25
      %s28 = sphi 0, %s26
      %s29 = sphi 0, %s27
      %s30 = sphi 0, %s28
      %s40 = sphi 0, %s42
      %s43 = sphi 0, %s40
      %s44 = sphi 0, %s43
      %s60 = sphi 0, %s44
      %s66 = sphi 0, %s68
      %s69 = sphi 0, %s66
      %s70 = sphi 0, %s69
      %s86 = sphi 0, %s70
      %s92 = sphi 0, %s94
      %s95 = sphi 0, %s92
      %s96 = sphi 0, %s95
      %s112 = sphi 0, %s96
      %s118 = sphi 0, %s120
      %s121 = sphi 0, %s118
      %s122 = sphi 0, %s121
      %s138 = sphi 0, %s122
    $region4: #{tpu_custom_call.1} parent=1 // loop_header_branch
      %21 = sbr.rel (%p19) target = $region8
    $region5: #{tpu_custom_call.1} parent=1 // loop_body
      %s23 = ssub.s32 %s18, 1
      %s24 = ssub.s32 %s18, 2
      %s31 = sadd.s32 1, %s26
      %p32 = scmp.ge.s32.totalorder %s31, 4
      %s33 = scalar_select %p32, 0, %s31
      %s34 = sadd.s32 1, %s25
      %s35 = scalar_select %p32, %s34, %s25
      %p36 = scmp.ge.s32.totalorder %s35, 3
      %s37 = scalar_select %p36, 0, %s35
      %s38 = ssub.s32 %s25, %s37
      %p39 = scmp.eq.s32.totalorder %s38, 0
      %s41 = sadd.s32 %s40, 1
      %s42 = scalar_select %p39, %s40, %s41
      %p45 = pneg %p39
      %p46 = scmp.eq.s32.totalorder %s18, 11
      %p47 = por %p45, %p46
      %p48 = scmp.ne.s32.totalorder %s40, %s43
      %p49 = scmp.eq.s32.totalorder %s18, 0
      %p50 = por %p48, %p49
      %p51 = scmp.ne.s32.totalorder %s40, %s43
      %p52 = scmp.eq.s32.totalorder %s23, 11
      %p53 = por %p51, %p52
      %p54 = scmp.ne.s32.totalorder %s43, %s44
      %p55 = scmp.eq.s32.totalorder %s23, 0
      %p56 = por %p54, %p55
      %p57 = scmp.ne.s32.totalorder %s43, %s44
      %p58 = scmp.eq.s32.totalorder %s24, 11
      %p59 = por %p57, %p58
      %p61 = scmp.ne.s32.totalorder %s44, %s60
      %p62 = scmp.eq.s32.totalorder %s24, 0
      %p63 = por %p61, %p62
      %s64 = ssub.s32 %s26, %s33
      %p65 = scmp.eq.s32.totalorder %s64, 0
      %s67 = sadd.s32 %s66, 1
      %s68 = scalar_select %p65, %s66, %s67
      %p71 = pneg %p65
      %p72 = scmp.eq.s32.totalorder %s18, 11
      %p73 = por %p71, %p72
      %p74 = scmp.ne.s32.totalorder %s66, %s69
      %p75 = scmp.eq.s32.totalorder %s18, 0
      %p76 = por %p74, %p75
      %p77 = scmp.ne.s32.totalorder %s66, %s69
      %p78 = scmp.eq.s32.totalorder %s23, 11
      %p79 = por %p77, %p78
      %p80 = scmp.ne.s32.totalorder %s69, %s70
      %p81 = scmp.eq.s32.totalorder %s23, 0
      %p82 = por %p80, %p81
      %p83 = scmp.ne.s32.totalorder %s69, %s70
      %p84 = scmp.eq.s32.totalorder %s24, 11
      %p85 = por %p83, %p84
      %p87 = scmp.ne.s32.totalorder %s70, %s86
      %p88 = scmp.eq.s32.totalorder %s24, 0
      %p89 = por %p87, %p88
      %s90 = ssub.s32 %s26, %s33
      %p91 = scmp.eq.s32.totalorder %s90, 0
      %s93 = sadd.s32 %s92, 1
      %s94 = scalar_select %p91, %s92, %s93
      %p97 = pneg %p91
      %p98 = scmp.eq.s32.totalorder %s18, 11
      %p99 = por %p97, %p98
      %p100 = scmp.ne.s32.totalorder %s92, %s95
      %p101 = scmp.eq.s32.totalorder %s18, 0
      %p102 = por %p100, %p101
      %p103 = scmp.ne.s32.totalorder %s92, %s95
      %p104 = scmp.eq.s32.totalorder %s23, 11
      %p105 = por %p103, %p104
      %p106 = scmp.ne.s32.totalorder %s95, %s96
      %p107 = scmp.eq.s32.totalorder %s23, 0
      %p108 = por %p106, %p107
      %p109 = scmp.ne.s32.totalorder %s95, %s96
      %p110 = scmp.eq.s32.totalorder %s24, 11
      %p111 = por %p109, %p110
      %p113 = scmp.ne.s32.totalorder %s96, %s112
      %p114 = scmp.eq.s32.totalorder %s24, 0
      %p115 = por %p113, %p114
      %s116 = ssub.s32 %s25, %s37
      %p117 = scmp.eq.s32.totalorder %s116, 0
      %s119 = sadd.s32 %s118, 1
      %s120 = scalar_select %p117, %s118, %s119
      %p123 = pneg %p117
      %p124 = scmp.eq.s32.totalorder %s18, 11
      %p125 = por %p123, %p124
      %p126 = scmp.ne.s32.totalorder %s118, %s121
      %p127 = scmp.eq.s32.totalorder %s18, 0
      %p128 = por %p126, %p127
      %p129 = scmp.ne.s32.totalorder %s118, %s121
      %p130 = scmp.eq.s32.totalorder %s23, 11
      %p131 = por %p129, %p130
      %p132 = scmp.ne.s32.totalorder %s121, %s122
      %p133 = scmp.eq.s32.totalorder %s23, 0
      %p134 = por %p132, %p133
      %p135 = scmp.ne.s32.totalorder %s121, %s122
      %p136 = scmp.eq.s32.totalorder %s24, 11
      %p137 = por %p135, %p136
      %p139 = scmp.ne.s32.totalorder %s122, %s138
      %p140 = scmp.eq.s32.totalorder %s24, 0
      %p141 = por %p139, %p140
      %p142 = scmp.le.s32.totalorder 1, %s18
      %p143 = scmp.lt.s32.totalorder %s18, 13
      %p144 = pnand %p142, %p143
      %p145 = pneg %p144
      // Predicated region
      $region9: #{tpu_custom_call.1} parent=5 // pred_check
        _
      $region10: #{tpu_custom_call.1} parent=5 // pred_check_branch
        %147 = sbr.rel (%p144) target = $region12
      $region11: #{tpu_custom_call.1} parent=5 // pred_region
        %s148 = ssub.s32 %s18, 1
      $region12: #{tpu_custom_call.1} parent=5 // pred_fallthru
        _
      %p149 = scmp.lt.s32.totalorder %s18, 12
      // Predicated region
      $region13: #{tpu_custom_call.1} parent=5 // pred_check
        %p150 = pneg %p149
      $region14: #{tpu_custom_call.1} parent=5 // pred_check_branch
        %152 = sbr.rel (%p150) target = $region16
      $region15: #{tpu_custom_call.1} parent=5 // pred_region
        // Predicated region
        $region17: #{tpu_custom_call.1} parent=15 // pred_check
          %p153 = pneg %p50
        $region18: #{tpu_custom_call.1} parent=15 // pred_check_branch
          %155 = sbr.rel (%p153) target = $region20
        $region19: #{tpu_custom_call.1} parent=15 // pred_region
          %s156 = sand.u32 %s40, 1
          %s157 = scalar_lea.sflag [#allocation4], %s156
          %s158 = sand.u32 %s40, 1
          %s159 = smul.addr %s158, 16
          %s160 = scalar_lea.vmem [#allocation3], %s159
          %s161 = smul.u32 2, %s25
          %s163 = ssub.s32 256, 256
          %164 = vsyncadd %s157, %s163
          %s165 = smul.addr %s161, 2
          %s166 = smul.addr %s165, 64
          %s167 = scalar_lea.hbm %s0, %s166
          %s168 = sshll.u32 %s160, 4
          %s169 = int_to_ptr.vmem [resolvable:$true] %s168
          %174 = dma.hbm_to_vmem [thread:$0]  %s167, 256, %s169, %s157, 128, 128, 8
        $region20: #{tpu_custom_call.1} parent=15 // pred_fallthru
          _
        // Predicated region
        $region21: #{tpu_custom_call.1} parent=15 // pred_check
          %p175 = pneg %p76
        $region22: #{tpu_custom_call.1} parent=15 // pred_check_branch
          %177 = sbr.rel (%p175) target = $region24
        $region23: #{tpu_custom_call.1} parent=15 // pred_region
          %s178 = sand.u32 %s18, 1
          %s179 = scalar_lea.sflag [#allocation7], %s178
          %s180 = sand.u32 %s66, 1
          %s181 = smul.addr %s180, 256
          %s182 = scalar_lea.vmem [#allocation6], %s181
          %s183 = smul.u32 2, %s26
          %s185 = ssub.s32 4096, 4096
          %186 = vsyncadd %s179, %s185
          %s187 = smul.addr %s183, 64
          %s188 = scalar_lea.hbm %s1, %s187
          %s189 = sshll.u32 %s182, 4
          %s190 = int_to_ptr.vmem [resolvable:$true] %s189
          %195 = dma.hbm_to_vmem [thread:$0]  %s188, 4096, %s190, %s179, 512, 128, 8
        $region24: #{tpu_custom_call.1} parent=15 // pred_fallthru
          _
        // Predicated region
        $region25: #{tpu_custom_call.1} parent=15 // pred_check
          %p196 = pneg %p102
        $region26: #{tpu_custom_call.1} parent=15 // pred_check_branch
          %198 = sbr.rel (%p196) target = $region28
        $region27: #{tpu_custom_call.1} parent=15 // pred_region
          %s199 = sand.u32 %s18, 1
          %s200 = scalar_lea.sflag [#allocation7], %s199
          %s201 = sand.u32 %s92, 1
          %s202 = smul.addr %s201, 128
          %s203 = scalar_lea.vmem [#allocation8], %s202
          %s204 = smul.u32 16, %s26
          %s206 = ssub.s32 2048, 2048
          %207 = vsyncadd %s200, %s206
          %s208 = smul.addr %s204, 2
          %s209 = smul.addr %s208, 64
          %s210 = scalar_lea.hbm %s2, %s209
          %s211 = sshll.u32 %s203, 4
          %s212 = int_to_ptr.vmem [resolvable:$true] %s211
          %217 = dma.hbm_to_vmem [thread:$0]  %s210, 2048, %s212, %s200, 128, 128, 8
        $region28: #{tpu_custom_call.1} parent=15 // pred_fallthru
          _
      $region16: #{tpu_custom_call.1} parent=5 // pred_fallthru
        _
      %p218 = scmp.le.s32.totalorder 1, %s18
      %p219 = scmp.lt.s32.totalorder %s18, 13
      %p220 = pnand %p218, %p219
      %p221 = pneg %p220
      // Predicated region
      $region29: #{tpu_custom_call.1} parent=5 // pred_check
        _
      $region30: #{tpu_custom_call.1} parent=5 // pred_check_branch
        %223 = sbr.rel (%p220) target = $region32
      $region31: #{tpu_custom_call.1} parent=5 // pred_region
        %s224 = ssub.s32 %s18, 1
        %s225 = sand.u32 %s43, 1
        %s226 = scalar_lea.sflag [#allocation4], %s225
        %s227 = sand.u32 %s43, 1
        %s228 = smul.addr %s227, 16
        %s229 = scalar_lea.vmem [#allocation3], %s228
        // Predicated region
        $region33: #{tpu_custom_call.1} parent=31 // pred_check
          %p230 = pneg %p56
        $region34: #{tpu_custom_call.1} parent=31 // pred_check_branch
          %232 = sbr.rel (%p230) target = $region36
        $region35: #{tpu_custom_call.1} parent=31 // pred_region
          %233 = dma.done %s226, 256
        $region36: #{tpu_custom_call.1} parent=31 // pred_fallthru
          _
        %s234 = sand.u32 %s23, 1
        %s235 = scalar_lea.sflag [#allocation7], %s234
        %s236 = sand.u32 %s69, 1
        %s237 = smul.addr %s236, 256
        %s238 = scalar_lea.vmem [#allocation6], %s237
        // Predicated region
        $region37: #{tpu_custom_call.1} parent=31 // pred_check
          %p239 = pneg %p82
        $region38: #{tpu_custom_call.1} parent=31 // pred_check_branch
          %241 = sbr.rel (%p239) target = $region40
        $region39: #{tpu_custom_call.1} parent=31 // pred_region
          %242 = dma.done %s235, 4096
        $region40: #{tpu_custom_call.1} parent=31 // pred_fallthru
          _
        %s243 = sand.u32 %s23, 1
        %s244 = scalar_lea.sflag [#allocation7], %s243
        %s245 = sand.u32 %s95, 1
        %s246 = smul.addr %s245, 128
        %s247 = scalar_lea.vmem [#allocation8], %s246
        // Predicated region
        $region41: #{tpu_custom_call.1} parent=31 // pred_check
          %p248 = pneg %p108
        $region42: #{tpu_custom_call.1} parent=31 // pred_check_branch
          %250 = sbr.rel (%p248) target = $region44
        $region43: #{tpu_custom_call.1} parent=31 // pred_region
          %251 = dma.done %s244, 2048
        $region44: #{tpu_custom_call.1} parent=31 // pred_fallthru
          _
        %s252 = sand.u32 %s43, 1
        %s253 = scalar_lea.sflag [#allocation4], %s252
        %s254 = sand.u32 %s43, 1
        %s255 = smul.addr %s254, 16
        %s256 = scalar_lea.vmem [#allocation3], %s255
        %p257 = pneg %p56
        %p258 = pneg %p53
        %s259 = sand.u32 %s23, 1
        %s260 = scalar_lea.sflag [#allocation7], %s259
        %s261 = sand.u32 %s69, 1
        %s262 = smul.addr %s261, 256
        %s263 = scalar_lea.vmem [#allocation6], %s262
        %p264 = pneg %p82
        %p265 = pneg %p79
        %s266 = sand.u32 %s23, 1
        %s267 = scalar_lea.sflag [#allocation7], %s266
        %s268 = sand.u32 %s95, 1
        %s269 = smul.addr %s268, 128
        %s270 = scalar_lea.vmem [#allocation8], %s269
        %p271 = pneg %p108
        %p272 = pneg %p105
        %p273 = pneg %p134
        %p274 = pneg %p131
        %s275 = sand.u32 %s121, 1
        %s276 = scalar_lea.sflag [#allocation5], %s275
        %s277 = sand.u32 %s121, 1
        %s278 = smul.addr %s277, 16
        %s279 = scalar_lea.vmem [#allocation9], %s278
        %s280 = smul.u32 2, %s27
        %s281 = smul.u32 2, %s28
        %s282 = smul.u32 16, %s28
        %s283 = smul.u32 2, %s27
        %p285 = scmp.eq.s32.totalorder %s28, 0
        // Predicated region
        $region45: #{tpu_custom_call.1} parent=31 // pred_check
          %p286 = pneg %p285
        $region46: #{tpu_custom_call.1} parent=31 // pred_check_branch
          %288 = sbr.rel (%p286) target = $region48
        $region47: #{tpu_custom_call.1} parent=31 // pred_region
          %289 = vst [vmem:[#allocation2] sm:$0xff] 0.0
          %290 = vst [vmem:[#allocation2 + $0x8] sm:$0xff] 0.0
          %291 = vst [vmem:[#allocation2 + $0x10] sm:$0xff] 0.0
          %292 = vst [vmem:[#allocation2 + $0x18] sm:$0xff] 0.0
        $region48: #{tpu_custom_call.1} parent=31 // pred_fallthru
          _
        %v293 = vld [vmem:[%s229] sm:$0xff]
        %v294 = vld [vmem:[%s229 + $0x8] sm:$0xff]
        %v295 = vld [vmem:[%s238] sm:$0xff]
        %v296 = vld [vmem:[%s238 + $0x8] sm:$0xff]
        %v297 = vld [vmem:[%s238 + $0x10] sm:$0xff]
        %v298 = vld [vmem:[%s238 + $0x18] sm:$0xff]
        %v299 = vld [vmem:[%s238 + $0x20] sm:$0xff]
        %v300 = vld [vmem:[%s238 + $0x28] sm:$0xff]
        %v301 = vld [vmem:[%s238 + $0x30] sm:$0xff]
        %v302 = vld [vmem:[%s238 + $0x38] sm:$0xff]
        %v303 = vld [vmem:[%s238 + $0x40] sm:$0xff]
        %v304 = vld [vmem:[%s238 + $0x48] sm:$0xff]
        %v305 = vld [vmem:[%s238 + $0x50] sm:$0xff]
        %v306 = vld [vmem:[%s238 + $0x58] sm:$0xff]
        %v307 = vld [vmem:[%s238 + $0x60] sm:$0xff]
        %v308 = vld [vmem:[%s238 + $0x68] sm:$0xff]
        %v309 = vld [vmem:[%s238 + $0x70] sm:$0xff]
        %v310 = vld [vmem:[%s238 + $0x78] sm:$0xff]
        %v311 = vld [vmem:[%s238 + $0x80] sm:$0xff]
        %v312 = vld [vmem:[%s238 + $0x88] sm:$0xff]
        %v313 = vld [vmem:[%s238 + $0x90] sm:$0xff]
        %v314 = vld [vmem:[%s238 + $0x98] sm:$0xff]
        %v315 = vld [vmem:[%s238 + $0xa0] sm:$0xff]
        %v316 = vld [vmem:[%s238 + $0xa8] sm:$0xff]
        %v317 = vld [vmem:[%s238 + $0xb0] sm:$0xff]
        %v318 = vld [vmem:[%s238 + $0xb8] sm:$0xff]
        %v319 = vld [vmem:[%s238 + $0xc0] sm:$0xff]
        %v320 = vld [vmem:[%s238 + $0xc8] sm:$0xff]
        %v321 = vld [vmem:[%s238 + $0xd0] sm:$0xff]
        %v322 = vld [vmem:[%s238 + $0xd8] sm:$0xff]
        %v323 = vld [vmem:[%s238 + $0xe0] sm:$0xff]
        %v324 = vld [vmem:[%s238 + $0xe8] sm:$0xff]
        %v325 = vld [vmem:[%s238 + $0xf0] sm:$0xff]
        %v326 = vld [vmem:[%s238 + $0xf8] sm:$0xff]
        %v329 = vunpack.c.l.b16 %v293
        %v330 = vunpack.c.h.b16 %v293
        %v331 = vunpack.c.l.b16 %v294
        %v332 = vunpack.c.h.b16 %v294
        %v333 = vpack.c.b16 %v331, %v329
        %v334 = vpack.c.b16 %v332, %v330
        %v369 = vunpack.c.l.b16 %v295
        %v370 = vunpack.c.h.b16 %v295
        %v371 = vunpack.c.l.b16 %v296
        %v372 = vunpack.c.h.b16 %v296
        %v373 = vunpack.c.l.b16 %v297
        %v374 = vunpack.c.h.b16 %v297
        %v375 = vunpack.c.l.b16 %v298
        %v376 = vunpack.c.h.b16 %v298
        %v377 = vunpack.c.l.b16 %v299
        %v378 = vunpack.c.h.b16 %v299
        %v379 = vunpack.c.l.b16 %v300
        %v380 = vunpack.c.h.b16 %v300
        %v381 = vunpack.c.l.b16 %v301
        %v382 = vunpack.c.h.b16 %v301
        %v383 = vunpack.c.l.b16 %v302
        %v384 = vunpack.c.h.b16 %v302
        %v385 = vunpack.c.l.b16 %v303
        %v386 = vunpack.c.h.b16 %v303
        %v387 = vunpack.c.l.b16 %v304
        %v388 = vunpack.c.h.b16 %v304
        %v389 = vunpack.c.l.b16 %v305
        %v390 = vunpack.c.h.b16 %v305
        %v391 = vunpack.c.l.b16 %v306
        %v392 = vunpack.c.h.b16 %v306
        %v393 = vunpack.c.l.b16 %v307
        %v394 = vunpack.c.h.b16 %v307
        %v395 = vunpack.c.l.b16 %v308
        %v396 = vunpack.c.h.b16 %v308
        %v397 = vunpack.c.l.b16 %v309
        %v398 = vunpack.c.h.b16 %v309
        %v399 = vunpack.c.l.b16 %v310
        %v400 = vunpack.c.h.b16 %v310
        %v401 = vunpack.c.l.b16 %v311
        %v402 = vunpack.c.h.b16 %v311
        %v403 = vunpack.c.l.b16 %v312
        %v404 = vunpack.c.h.b16 %v312
        %v405 = vunpack.c.l.b16 %v313
        %v406 = vunpack.c.h.b16 %v313
        %v407 = vunpack.c.l.b16 %v314
        %v408 = vunpack.c.h.b16 %v314
        %v409 = vunpack.c.l.b16 %v315
        %v410 = vunpack.c.h.b16 %v315
        %v411 = vunpack.c.l.b16 %v316
        %v412 = vunpack.c.h.b16 %v316
        %v413 = vunpack.c.l.b16 %v317
        %v414 = vunpack.c.h.b16 %v317
        %v415 = vunpack.c.l.b16 %v318
        %v416 = vunpack.c.h.b16 %v318
        %v417 = vunpack.c.l.b16 %v319
        %v418 = vunpack.c.h.b16 %v319
        %v419 = vunpack.c.l.b16 %v320
        %v420 = vunpack.c.h.b16 %v320
        %v421 = vunpack.c.l.b16 %v321
        %v422 = vunpack.c.h.b16 %v321
        %v423 = vunpack.c.l.b16 %v322
        %v424 = vunpack.c.h.b16 %v322
        %v425 = vunpack.c.l.b16 %v323
        %v426 = vunpack.c.h.b16 %v323
        %v427 = vunpack.c.l.b16 %v324
        %v428 = vunpack.c.h.b16 %v324
        %v429 = vunpack.c.l.b16 %v325
        %v430 = vunpack.c.h.b16 %v325
        %v431 = vunpack.c.l.b16 %v326
        %v432 = vunpack.c.h.b16 %v326
        %v433 = vpack.c.b16 %v371, %v369
        %v434 = vpack.c.b16 %v372, %v370
        %v435 = vpack.c.b16 %v375, %v373
        %v436 = vpack.c.b16 %v376, %v374
        %v437 = vpack.c.b16 %v379, %v377
        %v438 = vpack.c.b16 %v380, %v378
        %v439 = vpack.c.b16 %v383, %v381
        %v440 = vpack.c.b16 %v384, %v382
        %v441 = vpack.c.b16 %v387, %v385
        %v442 = vpack.c.b16 %v388, %v386
        %v443 = vpack.c.b16 %v391, %v389
        %v444 = vpack.c.b16 %v392, %v390
        %v445 = vpack.c.b16 %v395, %v393
        %v446 = vpack.c.b16 %v396, %v394
        %v447 = vpack.c.b16 %v399, %v397
        %v448 = vpack.c.b16 %v400, %v398
        %v449 = vpack.c.b16 %v403, %v401
        %v450 = vpack.c.b16 %v404, %v402
        %v451 = vpack.c.b16 %v407, %v405
        %v452 = vpack.c.b16 %v408, %v406
        %v453 = vpack.c.b16 %v411, %v409
        %v454 = vpack.c.b16 %v412, %v410
        %v455 = vpack.c.b16 %v415, %v413
        %v456 = vpack.c.b16 %v416, %v414
        %v457 = vpack.c.b16 %v419, %v417
        %v458 = vpack.c.b16 %v420, %v418
        %v459 = vpack.c.b16 %v423, %v421
        %v460 = vpack.c.b16 %v424, %v422
        %v461 = vpack.c.b16 %v427, %v425
        %v462 = vpack.c.b16 %v428, %v426
        %v463 = vpack.c.b16 %v431, %v429
        %v464 = vpack.c.b16 %v432, %v430
        %497 = vmatprep.subr.bf16.mxu0 %v448
        %498 = vmatpush1.bf16.msra.mxu0 %v447
        %499 = vmatprep.subr.bf16.mxu0 %v446
        %500 = vmatpush1.bf16.msra.mxu0 %v445
        %501 = vmatprep.subr.bf16.mxu0 %v444
        %502 = vmatpush1.bf16.msra.mxu0 %v443
        %503 = vmatprep.subr.bf16.mxu0 %v442
        %504 = vmatpush1.bf16.msra.mxu0 %v441
        %505 = vmatprep.subr.bf16.mxu0 %v440
        %506 = vmatpush1.bf16.msra.mxu0 %v439
        %507 = vmatprep.subr.bf16.mxu0 %v438
        %508 = vmatpush1.bf16.msra.mxu0 %v437
        %509 = vmatprep.subr.bf16.mxu0 %v436
        %510 = vmatpush1.bf16.msra.mxu0 %v435
        %511 = vmatprep.subr.bf16.mxu0 %v434
        %512 = vmatpush1.bf16.msra.mxu0 %v433
        %513 = vmatprep.subr.bf16.mxu0 %v464
        %514 = vmatpush2.bf16.msra.mxu0 %v463
        %515 = vmatprep.subr.bf16.mxu0 %v462
        %516 = vmatpush2.bf16.msra.mxu0 %v461
        %517 = vmatprep.subr.bf16.mxu0 %v460
        %518 = vmatpush2.bf16.msra.mxu0 %v459
        %519 = vmatprep.subr.bf16.mxu0 %v458
        %520 = vmatpush2.bf16.msra.mxu0 %v457
        %521 = vmatprep.subr.bf16.mxu0 %v456
        %522 = vmatpush2.bf16.msra.mxu0 %v455
        %523 = vmatprep.subr.bf16.mxu0 %v454
        %524 = vmatpush2.bf16.msra.mxu0 %v453
        %525 = vmatprep.subr.bf16.mxu0 %v452
        %526 = vmatpush2.bf16.msra.mxu0 %v451
        %527 = vmatprep.subr.bf16.mxu0 %v450
        %528 = vmatpush2.bf16.msra.mxu0 %v449
        %529 = vmatprep.mubr.bf16.mxu0 %v334
        %530 = vmatmul.mubr.bf16.gmra.mxu0 %v333
        %v531 = vpop.f32.mrf.mxu0
        %v532 = vadd.f32 0.0, %v531
        %v533 = vpop.f32.mrf.mxu0
        %v534 = vadd.f32 0.0, %v533
        %v535 = vpop.f32.mrf.mxu0
        %v536 = vadd.f32 0.0, %v535
        %v537 = vpop.f32.mrf.mxu0
        %v538 = vadd.f32 0.0, %v537
        %539 = vdwg.mxu0
        %v540 = vxor.u32 %v532, 2147483648
        %v541 = vxor.u32 %v536, 2147483648
        %v542 = vmul.f32 %v540, 1.442695
        %v543 = vpow.pop %v542
        %v544 = vmul.f32 %v541, 1.442695
        %v545 = vpow.pop %v544
        %v546 = vadd.f32 %v543, 1.0
        %v547 = vadd.f32 %v545, 1.0
        %v548 = vrcp.pop %v546
        %v549 = vmul.f32 1.0, %v548
        %v550 = vrcp.pop %v547
        %v551 = vmul.f32 1.0, %v550
        %v552 = vmul.f32 %v532, %v549
        %v553 = vmul.f32 %v536, %v551
        %v554 = vmul.f32 %v552, %v534
        %v555 = vmul.f32 %v553, %v538
        %v556 = vld [vmem:[#allocation2] sm:$0xff]
        %v557 = vld [vmem:[#allocation2 + $0x8] sm:$0xff]
        %v558 = vld [vmem:[#allocation2 + $0x10] sm:$0xff]
        %v559 = vld [vmem:[#allocation2 + $0x18] sm:$0xff]
        %v560 = vpack.c.bf16 %v555, %v554
        %v561 = vld [vmem:[%s247] sm:$0xff]
        %v562 = vld [vmem:[%s247 + $0x8] sm:$0xff]
        %v563 = vld [vmem:[%s247 + $0x10] sm:$0xff]
        %v564 = vld [vmem:[%s247 + $0x18] sm:$0xff]
        %v565 = vld [vmem:[%s247 + $0x20] sm:$0xff]
        %v566 = vld [vmem:[%s247 + $0x28] sm:$0xff]
        %v567 = vld [vmem:[%s247 + $0x30] sm:$0xff]
        %v568 = vld [vmem:[%s247 + $0x38] sm:$0xff]
        %v569 = vld [vmem:[%s247 + $0x40] sm:$0xff]
        %v570 = vld [vmem:[%s247 + $0x48] sm:$0xff]
        %v571 = vld [vmem:[%s247 + $0x50] sm:$0xff]
        %v572 = vld [vmem:[%s247 + $0x58] sm:$0xff]
        %v573 = vld [vmem:[%s247 + $0x60] sm:$0xff]
        %v574 = vld [vmem:[%s247 + $0x68] sm:$0xff]
        %v575 = vld [vmem:[%s247 + $0x70] sm:$0xff]
        %v576 = vld [vmem:[%s247 + $0x78] sm:$0xff]
        %v593 = vunpack.c.l.b16 %v561
        %v594 = vunpack.c.h.b16 %v561
        %v595 = vunpack.c.l.b16 %v562
        %v596 = vunpack.c.h.b16 %v562
        %v597 = vunpack.c.l.b16 %v563
        %v598 = vunpack.c.h.b16 %v563
        %v599 = vunpack.c.l.b16 %v564
        %v600 = vunpack.c.h.b16 %v564
        %v601 = vunpack.c.l.b16 %v565
        %v602 = vunpack.c.h.b16 %v565
        %v603 = vunpack.c.l.b16 %v566
        %v604 = vunpack.c.h.b16 %v566
        %v605 = vunpack.c.l.b16 %v567
        %v606 = vunpack.c.h.b16 %v567
        %v607 = vunpack.c.l.b16 %v568
        %v608 = vunpack.c.h.b16 %v568
        %v609 = vunpack.c.l.b16 %v569
        %v610 = vunpack.c.h.b16 %v569
        %v611 = vunpack.c.l.b16 %v570
        %v612 = vunpack.c.h.b16 %v570
        %v613 = vunpack.c.l.b16 %v571
        %v614 = vunpack.c.h.b16 %v571
        %v615 = vunpack.c.l.b16 %v572
        %v616 = vunpack.c.h.b16 %v572
        %v617 = vunpack.c.l.b16 %v573
        %v618 = vunpack.c.h.b16 %v573
        %v619 = vunpack.c.l.b16 %v574
        %v620 = vunpack.c.h.b16 %v574
        %v621 = vunpack.c.l.b16 %v575
        %v622 = vunpack.c.h.b16 %v575
        %v623 = vunpack.c.l.b16 %v576
        %v624 = vunpack.c.h.b16 %v576
        %v625 = vpack.c.b16 %v595, %v593
        %v626 = vpack.c.b16 %v596, %v594
        %v627 = vpack.c.b16 %v599, %v597
        %v628 = vpack.c.b16 %v600, %v598
        %v629 = vpack.c.b16 %v603, %v601
        %v630 = vpack.c.b16 %v604, %v602
        %v631 = vpack.c.b16 %v607, %v605
        %v632 = vpack.c.b16 %v608, %v606
        %v633 = vpack.c.b16 %v611, %v609
        %v634 = vpack.c.b16 %v612, %v610
        %v635 = vpack.c.b16 %v615, %v613
        %v636 = vpack.c.b16 %v616, %v614
        %v637 = vpack.c.b16 %v619, %v617
        %v638 = vpack.c.b16 %v620, %v618
        %v639 = vpack.c.b16 %v623, %v621
        %v640 = vpack.c.b16 %v624, %v622
        %657 = vmatprep.subr.bf16.mxu0 %v640
        %658 = vmatpush1.bf16.msra.mxu0 %v639
        %659 = vmatprep.subr.bf16.mxu0 %v638
        %660 = vmatpush1.bf16.msra.mxu0 %v637
        %661 = vmatprep.subr.bf16.mxu0 %v636
        %662 = vmatpush1.bf16.msra.mxu0 %v635
        %663 = vmatprep.subr.bf16.mxu0 %v634
        %664 = vmatpush1.bf16.msra.mxu0 %v633
        %665 = vmatprep.subr.bf16.mxu0 %v632
        %666 = vmatpush1.bf16.msra.mxu0 %v631
        %667 = vmatprep.subr.bf16.mxu0 %v630
        %668 = vmatpush1.bf16.msra.mxu0 %v629
        %669 = vmatprep.subr.bf16.mxu0 %v628
        %670 = vmatpush1.bf16.msra.mxu0 %v627
        %671 = vmatprep.subr.bf16.mxu0 %v626
        %672 = vmatpush1.bf16.msra.mxu0 %v625
        %673 = vmatprep.subr.bf16.mxu0 0
        %674 = vmatpush2.bf16.msra.mxu0 0
        %675 = vmatprep.subr.bf16.mxu0 0
        %676 = vmatpush2.bf16.msra.mxu0 0
        %677 = vmatprep.subr.bf16.mxu0 0
        %678 = vmatpush2.bf16.msra.mxu0 0
        %679 = vmatprep.subr.bf16.mxu0 0
        %680 = vmatpush2.bf16.msra.mxu0 0
        %681 = vmatprep.subr.bf16.mxu0 0
        %682 = vmatpush2.bf16.msra.mxu0 0
        %683 = vmatprep.subr.bf16.mxu0 0
        %684 = vmatpush2.bf16.msra.mxu0 0
        %685 = vmatprep.subr.bf16.mxu0 0
        %686 = vmatpush2.bf16.msra.mxu0 0
        %687 = vmatprep.subr.bf16.mxu0 0
        %688 = vmatpush2.bf16.msra.mxu0 0
        %689 = vmatprep.mubr.bf16.mxu0 0
        %690 = vmatmul.mubr.bf16.gmra.mxu0 %v560
        %v691 = vpop.f32.mrf.mxu0
        %v692 = vadd.f32 0.0, %v691
        %v693 = vpop.f32.mrf.mxu0
        %v694 = vadd.f32 0.0, %v693
        %v695 = vpop.f32.mrf.mxu0
        %v696 = vadd.f32 0.0, %v695
        %v697 = vpop.f32.mrf.mxu0
        %v698 = vadd.f32 0.0, %v697
        %699 = vdwg.mxu0
        %v700 = vadd.f32 %v556, %v692
        %v701 = vadd.f32 %v557, %v694
        %v702 = vadd.f32 %v558, %v696
        %v703 = vadd.f32 %v559, %v698
        %704 = vst [vmem:[#allocation2] sm:$0xff] %v700
        %705 = vst [vmem:[#allocation2 + $0x8] sm:$0xff] %v701
        %706 = vst [vmem:[#allocation2 + $0x10] sm:$0xff] %v702
        %707 = vst [vmem:[#allocation2 + $0x18] sm:$0xff] %v703
        %p708 = scmp.eq.s32.totalorder %s28, 3
        // Predicated region
        $region49: #{tpu_custom_call.1} parent=31 // pred_check
          %p709 = pneg %p708
        $region50: #{tpu_custom_call.1} parent=31 // pred_check_branch
          %711 = sbr.rel (%p709) target = $region52
        $region51: #{tpu_custom_call.1} parent=31 // pred_region
          %v712 = vld [vmem:[#allocation2] sm:$0xff]
          %v713 = vld [vmem:[#allocation2 + $0x8] sm:$0xff]
          %v714 = vld [vmem:[#allocation2 + $0x10] sm:$0xff]
          %v715 = vld [vmem:[#allocation2 + $0x18] sm:$0xff]
          %v716 = vpack.c.bf16 %v714, %v712
          %v717 = vpack.c.bf16 %v715, %v713
          %v720 = vunpack.c.l.b16 %v716
          %v721 = vunpack.c.l.b16 %v717
          %v722 = vunpack.c.h.b16 %v716
          %v723 = vunpack.c.h.b16 %v717
          %v724 = vpack.c.b16 %v721, %v720
          %v725 = vpack.c.b16 %v723, %v722
          %728 = vst [vmem:[%s279] sm:$0xff] %v724
          %729 = vst [vmem:[%s279 + $0x8] sm:$0xff] %v725
        $region52: #{tpu_custom_call.1} parent=31 // pred_fallthru
          _
        %s730 = sand.u32 %s121, 1
        %s731 = scalar_lea.sflag [#allocation5], %s730
        %s732 = sand.u32 %s121, 1
        %s733 = smul.addr %s732, 16
        %s734 = scalar_lea.vmem [#allocation9], %s733
        // Predicated region
        $region53: #{tpu_custom_call.1} parent=31 // pred_check
          %p735 = pneg %p131
        $region54: #{tpu_custom_call.1} parent=31 // pred_check_branch
          %737 = sbr.rel (%p735) target = $region56
        $region55: #{tpu_custom_call.1} parent=31 // pred_region
          %s738 = smul.u32 2, %s27
          %s740 = ssub.s32 256, 256
          %741 = vsyncadd %s731, %s740
          %s742 = smul.addr %s738, 2
          %s743 = smul.addr %s742, 64
          %s744 = scalar_lea.hbm %s3, %s743
          %s745 = sshll.u32 %s734, 4
          %s746 = int_to_ptr.vmem [resolvable:$true] %s745
          %751 = dma.vmem_to_hbm [thread:$0]  %s746, 256, %s744, %s731, 128, 128, 8
        $region56: #{tpu_custom_call.1} parent=31 // pred_fallthru
          _
      $region32: #{tpu_custom_call.1} parent=5 // pred_fallthru
        _
      %p752 = scmp.le.s32.totalorder 2, %s18
      // Predicated region
      $region57: #{tpu_custom_call.1} parent=5 // pred_check
        %p753 = pneg %p752
      $region58: #{tpu_custom_call.1} parent=5 // pred_check_branch
        %755 = sbr.rel (%p753) target = $region60
      $region59: #{tpu_custom_call.1} parent=5 // pred_region
        %s756 = ssub.s32 %s18, 2
        // Predicated region
        $region61: #{tpu_custom_call.1} parent=59 // pred_check
          %p757 = pneg %p137
        $region62: #{tpu_custom_call.1} parent=59 // pred_check_branch
          %759 = sbr.rel (%p757) target = $region64
        $region63: #{tpu_custom_call.1} parent=59 // pred_region
          %s760 = sand.u32 %s122, 1
          %s761 = scalar_lea.sflag [#allocation5], %s760
          %s762 = sand.u32 %s122, 1
          %s763 = smul.addr %s762, 16
          %s764 = scalar_lea.vmem [#allocation9], %s763
          %765 = dma.done %s761, 256
        $region64: #{tpu_custom_call.1} parent=59 // pred_fallthru
          _
      $region60: #{tpu_custom_call.1} parent=5 // pred_fallthru
        _
    $region6: #{tpu_custom_call.1} parent=1 // loop_footer
      %s22 = sadd.s32 1, %s18
    $region7: #{tpu_custom_call.1} parent=1 // loop_footer_branch
      %17 = sbr.rel target = $region3
    $region8: #{tpu_custom_call.1} parent=1 // loop_exit
      _
    %766 = vsyncpa [#allocation4], 1
    %s767 = scalar_lea.sflag [#allocation4], 1
    %768 = vsyncpa %s767, 1
    %769 = vsyncpa [#allocation7], 1
    %s770 = scalar_lea.sflag [#allocation7], 1
    %771 = vsyncpa %s770, 1
    %772 = vsyncpa [#allocation5], 1
    %s773 = scalar_lea.sflag [#allocation5], 1
    %774 = vsyncpa %s773, 1

</llo_original>
